<compile_context>
chip_gen: v7x
topology: tpu7x:2x2x1
jax: 0.10.0
libtpu: 0.0.40
codegen_flags: <defaults>
</compile_context>

<pallas_src>
import numpy as np
import jax
import jax.numpy as jnp
from jax import lax
from jax.experimental import pallas as pl
from jax.experimental.pallas import tpu as pltpu


# ---------------------------------------------------------------------------
# Helpers / static buffers (same construction as the torch module __init__)
# ---------------------------------------------------------------------------
def _round_up(x, m):
    return ((x + m - 1) // m) * m


def _pick_tile_h(H):
    # 8-row tiles (one sublane group) when possible; fall back to full image.
    return 8 if H % 8 == 0 else H


def _make_circle_constants(circle_radius):
    k = 2 * circle_radius + 1
    x = np.tile(np.arange(k)[None, :], (k, 1)) + 1
    y = np.tile(np.arange(k)[:, None], (1, k)) + 1
    xy = np.stack((x, y), 0).astype(np.float32) - (k + 1) // 2      # (2, k, k), ch0 = x
    dists = np.sqrt((xy ** 2).sum(0))                                # (k, k)
    mask = (dists <= circle_radius).astype(np.float32)
    n_pix = float(mask.sum())
    center_threshold = float((dists * mask).sum() / n_pix + 0.5)
    return xy, mask, n_pix, center_threshold


# ---------------------------------------------------------------------------
# Kernel 1: circular Hough vote map (row-tiled, register-resident accumulator)
#   vote[b, i, j] = sum_{ki,kj in circle} |circle_offset(ki,kj)
#                     - reg[b, :, i+ki-r, j+kj-r]|_2 / n_pix + 1
# ---------------------------------------------------------------------------
def make_vote_kernel(tile_h, W, k, circle_mask_np, n_pix):
    r = k // 2
    inv_n = 1.0 / float(n_pix)

    def vote_kernel(reg_ref, vote_ref):
        t = pl.program_id(1)
        row0 = pl.multiple_of(t * tile_h, tile_h)
        acc = jnp.zeros((tile_h, W), jnp.float32)
        for ki in range(k):
            for kj in range(k):
                if circle_mask_np[ki, kj] == 0.0:
                    continue                       # masked circle points skipped at trace time
                cx = float(kj - r)                 # circle_coords x channel
                cy = float(ki - r)                 # circle_coords y channel
                rx = reg_ref[0, 0, pl.ds(row0 + ki, tile_h), kj:kj + W]
                ry = reg_ref[0, 1, pl.ds(row0 + ki, tile_h), kj:kj + W]
                dx = cx - rx
                dy = cy - ry
                acc = acc + jnp.sqrt(dx * dx + dy * dy)   # sqrt kept: threshold needs true L2
        vote_ref[0] = acc * inv_n + 1.0

    return vote_kernel


def vote_map_pallas(reg_pad, H, W, k, circle_mask, n_pix, tile_h):
    B, _, Hp, Wp = reg_pad.shape
    n_tiles = H // tile_h
    return pl.pallas_call(
        make_vote_kernel(tile_h, W, k, circle_mask, n_pix),
        out_shape=jax.ShapeDtypeStruct((B, H, W), jnp.float32),
        grid=(B, n_tiles),
        # Whole padded image per batch; block index is constant over the tile
        # axis so Pallas DMAs it once per batch and keeps it resident.
        in_specs=[pl.BlockSpec((1, 2, Hp, Wp), lambda b, t: (b, 0, 0, 0))],
        out_specs=pl.BlockSpec((1, tile_h, W), lambda b, t: (b, t, 0)),
        compiler_params=pltpu.CompilerParams(
            dimension_semantics=("parallel", "parallel")),
    )(reg_pad)


# ---------------------------------------------------------------------------
# Kernel 2: NMS (separable min-pool == -maxpool(-x)) + local-min keep + thresh
# ---------------------------------------------------------------------------
def make_nms_kernel(tile_h, W, nms_k, thresh):
    q = nms_k // 2
    rows = tile_h + 2 * q

    def nms_kernel(vpad_ref, out_ref, rowmin_ref):
        t = pl.program_id(1)
        row0 = pl.multiple_of(t * tile_h, tile_h)
        # 1-D min along W (lane shifts) for every row of the halo'd tile.
        rowmin = vpad_ref[0, pl.ds(row0, rows), 0:W]
        for dj in range(1, nms_k):
            rowmin = jnp.minimum(rowmin, vpad_ref[0, pl.ds(row0, rows), dj:dj + W])
        rowmin_ref[...] = rowmin
        # 1-D min along H (sublane shifts) of the row-min result.
        pooled = rowmin_ref[0:tile_h, :]
        for di in range(1, nms_k):
            pooled = jnp.minimum(pooled, rowmin_ref[di:di + tile_h, :])
        v = vpad_ref[0, pl.ds(row0 + q, tile_h), q:q + W]
        keep = (pooled == v) & (v < thresh)       # exact equality: min of stored values
        out_ref[0] = jnp.where(keep, v, 0.0)

    return nms_kernel


def nms_pallas(vote_pad, H, W, nms_k, thresh, tile_h):
    B, Hp, Wp = vote_pad.shape
    q = nms_k // 2
    n_tiles = H // tile_h
    return pl.pallas_call(
        make_nms_kernel(tile_h, W, nms_k, thresh),
        out_shape=jax.ShapeDtypeStruct((B, H, W), jnp.float32),
        grid=(B, n_tiles),
        in_specs=[pl.BlockSpec((1, Hp, Wp), lambda b, t: (b, 0, 0))],
        out_specs=pl.BlockSpec((1, tile_h, W), lambda b, t: (b, t, 0)),
        scratch_shapes=[pltpu.VMEM((tile_h + 2 * q, W), jnp.float32)],
        compiler_params=pltpu.CompilerParams(
            dimension_semantics=("parallel", "parallel")),
    )(vote_pad)


# ---------------------------------------------------------------------------
# Kernel 3: instance assignment (create_inst_maps)
#   inst[b, i, j] = (argmin_k |pred_xy[b,:,i,j] - center_xy[b,k]|) + 1, masked.
#   Uses squared distances (same argmin) and an unrolled fori_loop over K.
# ---------------------------------------------------------------------------
def make_inst_kernel(tile_h, W, K, unroll):
    def inst_kernel(cx_ref, cy_ref, pred_ref, things_ref, out_ref):
        b = pl.program_id(0)
        px = pred_ref[0, 0]                       # (tile_h, W)
        py = pred_ref[0, 1]

        def body(kk, carry):
            best_d2, best_i = carry
            cx = cx_ref[b, kk]
            cy = cy_ref[b, kk]
            dx = px - cx
            dy = py - cy
            d2 = dx * dx + dy * dy                # no sqrt: ordering unchanged
            upd = d2 < best_d2                    # strict < keeps first (torch argmin)
            best_i = jnp.where(upd, kk + 1, best_i)
            best_d2 = jnp.where(upd, d2, best_d2)
            return best_d2, best_i

        init = (jnp.full((tile_h, W), jnp.inf, jnp.float32),
                jnp.zeros((tile_h, W), jnp.int32))
        _, best_i = lax.fori_loop(0, K, body, init, unroll=unroll)
        out_ref[0] = jnp.where(things_ref[0] > 0, best_i, 0)

    return inst_kernel


def inst_map_pallas(cxs, cys, pred, things, H, W, K, tile_h):
    B = pred.shape[0]
    n_tiles = H // tile_h
    return pl.pallas_call(
        make_inst_kernel(tile_h, W, K, unroll=min(8, K)),
        out_shape=jax.ShapeDtypeStruct((B, H, W), jnp.int32),
        grid=(B, n_tiles),
        in_specs=[
            pl.BlockSpec(memory_space=pltpu.MemorySpace.SMEM),   # center x coords (B, K)
            pl.BlockSpec(memory_space=pltpu.MemorySpace.SMEM),   # center y coords (B, K)
            pl.BlockSpec((1, 2, tile_h, W), lambda b, t: (b, 0, t, 0)),  # center_coords_pred
            pl.BlockSpec((1, tile_h, W), lambda b, t: (b, t, 0)),        # things_segs
        ],
        out_specs=pl.BlockSpec((1, tile_h, W), lambda b, t: (b, t, 0)),
        compiler_params=pltpu.CompilerParams(
            dimension_semantics=("parallel", "parallel")),
    )(cxs, cys, pred, things)


# ---------------------------------------------------------------------------
# Module wrapper
# ---------------------------------------------------------------------------
class HoughRouting1Pallas:
    def __init__(self, nms_kernel_size=7, dims=(640, 640), top_k=200, circle_radius=5):
        self.kernel_size = nms_kernel_size
        self.top_k = top_k
        self.h, self.w = dims
        self.circle_radius = circle_radius
        self.circle_k_size = 2 * circle_radius + 1
        cc, cm, npix, thr = _make_circle_constants(circle_radius)
        self.circle_coords = cc                      # (2, k, k)
        self.circle_mask = cm                        # (k, k)
        self.n_pixels_in_circle = npix
        self.center_threshold = thr
        x = np.tile(np.arange(self.w)[None, :], (self.h, 1)) + 1
        y = np.tile(np.arange(self.h)[:, None], (1, self.w)) + 1
        self.xy_coords = jnp.asarray(np.stack((x, y), 0)[None].astype(np.float32))  # (1,2,H,W)

    def __call__(self, fg_pred, center_regressions, gt_fg=None):
        H, W = self.h, self.w
        B = center_regressions.shape[0]
        tile_h = _pick_tile_h(H)

        center_coords_pred = self.xy_coords - center_regressions          # (B,2,H,W)
        fg = fg_pred if gt_fg is None else gt_fg
        things = (fg[:, 0] >= 0.5).astype(jnp.int32)                       # (B,H,W)

        # --- vote map (get_patches + offset error), Pallas kernel 1 ---
        r = self.circle_radius
        Hp = _round_up(H + 2 * r, 8)
        Wp = _round_up(W + 2 * r, 128)                                     # lane-aligned pad
        reg_pad = jnp.pad(center_regressions,
                          ((0, 0), (0, 0), (r, Hp - H - r), (r, Wp - W - r)))
        vote = vote_map_pallas(reg_pad, H, W, self.circle_k_size,
                               self.circle_mask, self.n_pixels_in_circle, tile_h)

        # --- NMS + threshold, Pallas kernel 2 ---
        q = self.kernel_size // 2
        Hq = _round_up(H + 2 * q, 8)
        Wq = _round_up(W + 2 * q, 128)
        vote_pad = jnp.pad(vote, ((0, 0), (q, Hq - H - q), (q, Wq - W - q)),
                           constant_values=np.inf)
        center_map = nms_pallas(vote_pad, H, W, self.kernel_size,
                                self.center_threshold, tile_h)

        # --- get_centers: fixed-size surrogate of torch.nonzero + argsort (JAX glue) ---
        # lax.top_k on the negated errors is much cheaper than a full argsort
        # over H*W and yields the K smallest errors in ascending order.
        K = min(self.top_k, H * W)
        flat = center_map.reshape(B, H * W)
        vals = jnp.where(flat > 0, flat, jnp.inf)
        _, order = lax.top_k(-vals, K)                                      # (B,K) indices
        sel_errors = jnp.take_along_axis(vals, order, axis=-1)              # (B,K) ascending
        valid = jnp.isfinite(sel_errors)                                    # (B,K)
        ys = (order // W).astype(jnp.float32)
        xs = (order % W).astype(jnp.float32)
        cxs = jnp.where(valid, xs, 1e6).astype(jnp.float32)
        cys = jnp.where(valid, ys, 1e6).astype(jnp.float32)

        # --- create_inst_maps, Pallas kernel 3 ---
        inst = inst_map_pallas(cxs, cys, center_coords_pred, things, H, W, K, tile_h)
        num_valid = valid.sum(-1)
        inst = jnp.where((num_valid > 0)[:, None, None], inst, 0)

        # TODO(synk): get_instance_pixels (torch.unique + ragged per-instance point
        # lists) has no fixed-shape Pallas equivalent; we return the dense instance
        # map plus the center coordinates / errors / validity mask instead.
        centers_yx = jnp.stack([ys, xs], -1)                                # (B,K,2)
        return center_map, inst, centers_yx, sel_errors, valid


# ---------------------------------------------------------------------------
if __name__ == "__main__":
    B, H, W = 2, 16, 16
    hr = HoughRouting1Pallas(nms_kernel_size=5, dims=(H, W), top_k=8, circle_radius=2)

    key = jax.random.PRNGKey(0)
    k1, k2 = jax.random.split(key)
    fg_pred = jax.random.uniform(k1, (B, 1, H, W), dtype=jnp.float32)

    # Craft regressions so each image votes for one clear center (plus noise).
    centers_xy = jnp.asarray([[5.0, 6.0], [10.0, 9.0]], dtype=jnp.float32)   # (B, 2) = (x, y)
    noise = 0.1 * jax.random.normal(k2, (B, 2, H, W), dtype=jnp.float32)
    center_regressions = hr.xy_coords - centers_xy[:, :, None, None] + noise

    out = hr(fg_pred, center_regressions)
    center_map, inst_map, centers_yx, center_errs, valid = jax.block_until_ready(out)

    # --- pure-JAX reference of the hot path for a sanity check ---
    r, k = hr.circle_radius, hr.circle_k_size
    regp = jnp.pad(center_regressions, ((0, 0), (0, 0), (r, r), (r, r)))
    patches = jnp.stack([jnp.stack([regp[:, :, ki:ki + H, kj:kj + W] for kj in range(k)], -1)
                         for ki in range(k)], -2)                            # (B,2,H,W,k,k)
    off = jnp.asarray(hr.circle_coords).reshape(1, 2, 1, 1, k, k) - patches
    err = jnp.sqrt((off ** 2).sum(1))
    err = (err * jnp.asarray(hr.circle_mask).reshape(1, 1, 1, k, k)).sum((-1, -2)) \
        / hr.n_pixels_in_circle
    vote_ref = err + 1.0
    q = hr.kernel_size // 2
    vpad = jnp.pad(vote_ref, ((0, 0), (q, q), (q, q)), constant_values=np.inf)
    pooled = jnp.min(jnp.stack([vpad[:, di:di + H, dj:dj + W]
                                for di in range(hr.kernel_size)
                                for dj in range(hr.kernel_size)], 0), 0)
    center_ref = jnp.where((pooled == vote_ref) & (vote_ref < hr.center_threshold),
                           vote_ref, 0.0)
    np.testing.assert_allclose(np.asarray(center_map), np.asarray(center_ref),
                               rtol=1e-3, atol=1e-3)

    ccp = hr.xy_coords - center_regressions
    cx = jnp.where(valid, centers_yx[..., 1], 1e6)
    cy = jnp.where(valid, centers_yx[..., 0], 1e6)
    d2 = (ccp[:, 0, :, :, None] - cx[:, None, None, :]) ** 2 + \
         (ccp[:, 1, :, :, None] - cy[:, None, None, :]) ** 2
    ref_inst = (jnp.argmin(d2, -1) + 1).astype(jnp.int32) * \
        (fg_pred[:, 0] >= 0.5).astype(jnp.int32)
    ref_inst = jnp.where((valid.sum(-1) > 0)[:, None, None], ref_inst, 0)
    np.testing.assert_array_equal(np.asarray(inst_map), np.asarray(ref_inst))

    print("KERNEL_OK")
</pallas_src>

<mosaic_0001>
module attributes {stable_mosaic.version = 11 : i64} {
  func.func @vote_kernel(%arg0: i32, %arg1: i32, %arg2: memref<1x2x24x128xf32, #tpu.memory_space<vmem>>, %arg3: memref<1x8x16xf32, #tpu.memory_space<vmem>>) attributes {dimension_semantics = [#tpu.dimension_semantics<parallel>, #tpu.dimension_semantics<parallel>], iteration_bounds = array<i64: 2, 2>, scalar_prefetch = 0 : i64, scratch_operands = 0 : i64, tpu.core_type = #tpu.core_type<tc>, window_params = [{transform_indices = @transform_0, window_bounds = array<i64: 1, 2, 24, 128>}, {transform_indices = @transform_1, window_bounds = array<i64: 1, 8, 16>}]} {
    %c8_i32 = arith.constant 8 : i32
    %0 = arith.muli %arg1, %c8_i32 : i32
    %1 = tpu.assume_multiple %0, 8 : i32
    %cst = arith.constant 0.000000e+00 : f32
    %2 = vector.broadcast %cst : f32 to vector<8x16xf32>
    %c0_i32 = arith.constant 0 : i32
    %3 = arith.addi %1, %c0_i32 : i32
    %c0 = arith.constant 0 : index
    %c0_0 = arith.constant 0 : index
    %4 = arith.index_cast %3 : i32 to index
    %c2 = arith.constant 2 : index
    %5 = vector.load %arg2[%c0, %c0_0, %4, %c2] : memref<1x2x24x128xf32, #tpu.memory_space<vmem>>, vector<1x1x8x16xf32>
    %6 = vector.shape_cast %5 : vector<1x1x8x16xf32> to vector<8x16xf32>
    %c0_i32_1 = arith.constant 0 : i32
    %7 = arith.addi %1, %c0_i32_1 : i32
    %c0_2 = arith.constant 0 : index
    %c1 = arith.constant 1 : index
    %8 = arith.index_cast %7 : i32 to index
    %c2_3 = arith.constant 2 : index
    %9 = vector.load %arg2[%c0_2, %c1, %8, %c2_3] : memref<1x2x24x128xf32, #tpu.memory_space<vmem>>, vector<1x1x8x16xf32>
    %10 = vector.shape_cast %9 : vector<1x1x8x16xf32> to vector<8x16xf32>
    %cst_4 = arith.constant 0.000000e+00 : f32
    %11 = vector.broadcast %cst_4 : f32 to vector<8x16xf32>
    %12 = arith.subf %11, %6 : vector<8x16xf32>
    %cst_5 = arith.constant -2.000000e+00 : f32
    %13 = vector.broadcast %cst_5 : f32 to vector<8x16xf32>
    %14 = arith.subf %13, %10 : vector<8x16xf32>
    %15 = arith.mulf %12, %12 : vector<8x16xf32>
    %16 = arith.mulf %14, %14 : vector<8x16xf32>
    %17 = arith.addf %15, %16 : vector<8x16xf32>
    %18 = math.sqrt %17 : vector<8x16xf32>
    %19 = arith.addf %2, %18 : vector<8x16xf32>
    %c1_i32 = arith.constant 1 : i32
    %20 = arith.addi %1, %c1_i32 : i32
    %c0_6 = arith.constant 0 : index
    %c0_7 = arith.constant 0 : index
    %21 = arith.index_cast %20 : i32 to index
    %c1_8 = arith.constant 1 : index
    %22 = vector.load %arg2[%c0_6, %c0_7, %21, %c1_8] : memref<1x2x24x128xf32, #tpu.memory_space<vmem>>, vector<1x1x8x16xf32>
    %23 = vector.shape_cast %22 : vector<1x1x8x16xf32> to vector<8x16xf32>
    %c1_i32_9 = arith.constant 1 : i32
    %24 = arith.addi %1, %c1_i32_9 : i32
    %c0_10 = arith.constant 0 : index
    %c1_11 = arith.constant 1 : index
    %25 = arith.index_cast %24 : i32 to index
    %c1_12 = arith.constant 1 : index
    %26 = vector.load %arg2[%c0_10, %c1_11, %25, %c1_12] : memref<1x2x24x128xf32, #tpu.memory_space<vmem>>, vector<1x1x8x16xf32>
    %27 = vector.shape_cast %26 : vector<1x1x8x16xf32> to vector<8x16xf32>
    %cst_13 = arith.constant -1.000000e+00 : f32
    %28 = vector.broadcast %cst_13 : f32 to vector<8x16xf32>
    %29 = arith.subf %28, %23 : vector<8x16xf32>
    %cst_14 = arith.constant -1.000000e+00 : f32
    %30 = vector.broadcast %cst_14 : f32 to vector<8x16xf32>
    %31 = arith.subf %30, %27 : vector<8x16xf32>
    %32 = arith.mulf %29, %29 : vector<8x16xf32>
    %33 = arith.mulf %31, %31 : vector<8x16xf32>
    %34 = arith.addf %32, %33 : vector<8x16xf32>
    %35 = math.sqrt %34 : vector<8x16xf32>
    %36 = arith.addf %19, %35 : vector<8x16xf32>
    %c1_i32_15 = arith.constant 1 : i32
    %37 = arith.addi %1, %c1_i32_15 : i32
    %c0_16 = arith.constant 0 : index
    %c0_17 = arith.constant 0 : index
    %38 = arith.index_cast %37 : i32 to index
    %c2_18 = arith.constant 2 : index
    %39 = vector.load %arg2[%c0_16, %c0_17, %38, %c2_18] : memref<1x2x24x128xf32, #tpu.memory_space<vmem>>, vector<1x1x8x16xf32>
    %40 = vector.shape_cast %39 : vector<1x1x8x16xf32> to vector<8x16xf32>
    %c1_i32_19 = arith.constant 1 : i32
    %41 = arith.addi %1, %c1_i32_19 : i32
    %c0_20 = arith.constant 0 : index
    %c1_21 = arith.constant 1 : index
    %42 = arith.index_cast %41 : i32 to index
    %c2_22 = arith.constant 2 : index
    %43 = vector.load %arg2[%c0_20, %c1_21, %42, %c2_22] : memref<1x2x24x128xf32, #tpu.memory_space<vmem>>, vector<1x1x8x16xf32>
    %44 = vector.shape_cast %43 : vector<1x1x8x16xf32> to vector<8x16xf32>
    %cst_23 = arith.constant 0.000000e+00 : f32
    %45 = vector.broadcast %cst_23 : f32 to vector<8x16xf32>
    %46 = arith.subf %45, %40 : vector<8x16xf32>
    %cst_24 = arith.constant -1.000000e+00 : f32
    %47 = vector.broadcast %cst_24 : f32 to vector<8x16xf32>
    %48 = arith.subf %47, %44 : vector<8x16xf32>
    %49 = arith.mulf %46, %46 : vector<8x16xf32>
    %50 = arith.mulf %48, %48 : vector<8x16xf32>
    %51 = arith.addf %49, %50 : vector<8x16xf32>
    %52 = math.sqrt %51 : vector<8x16xf32>
    %53 = arith.addf %36, %52 : vector<8x16xf32>
    %c1_i32_25 = arith.constant 1 : i32
    %54 = arith.addi %1, %c1_i32_25 : i32
    %c0_26 = arith.constant 0 : index
    %c0_27 = arith.constant 0 : index
    %55 = arith.index_cast %54 : i32 to index
    %c3 = arith.constant 3 : index
    %56 = vector.load %arg2[%c0_26, %c0_27, %55, %c3] : memref<1x2x24x128xf32, #tpu.memory_space<vmem>>, vector<1x1x8x16xf32>
    %57 = vector.shape_cast %56 : vector<1x1x8x16xf32> to vector<8x16xf32>
    %c1_i32_28 = arith.constant 1 : i32
    %58 = arith.addi %1, %c1_i32_28 : i32
    %c0_29 = arith.constant 0 : index
    %c1_30 = arith.constant 1 : index
    %59 = arith.index_cast %58 : i32 to index
    %c3_31 = arith.constant 3 : index
    %60 = vector.load %arg2[%c0_29, %c1_30, %59, %c3_31] : memref<1x2x24x128xf32, #tpu.memory_space<vmem>>, vector<1x1x8x16xf32>
    %61 = vector.shape_cast %60 : vector<1x1x8x16xf32> to vector<8x16xf32>
    %cst_32 = arith.constant 1.000000e+00 : f32
    %62 = vector.broadcast %cst_32 : f32 to vector<8x16xf32>
    %63 = arith.subf %62, %57 : vector<8x16xf32>
    %cst_33 = arith.constant -1.000000e+00 : f32
    %64 = vector.broadcast %cst_33 : f32 to vector<8x16xf32>
    %65 = arith.subf %64, %61 : vector<8x16xf32>
    %66 = arith.mulf %63, %63 : vector<8x16xf32>
    %67 = arith.mulf %65, %65 : vector<8x16xf32>
    %68 = arith.addf %66, %67 : vector<8x16xf32>
    %69 = math.sqrt %68 : vector<8x16xf32>
    %70 = arith.addf %53, %69 : vector<8x16xf32>
    %c2_i32 = arith.constant 2 : i32
    %71 = arith.addi %1, %c2_i32 : i32
    %c0_34 = arith.constant 0 : index
    %c0_35 = arith.constant 0 : index
    %72 = arith.index_cast %71 : i32 to index
    %c0_36 = arith.constant 0 : index
    %73 = vector.load %arg2[%c0_34, %c0_35, %72, %c0_36] : memref<1x2x24x128xf32, #tpu.memory_space<vmem>>, vector<1x1x8x16xf32>
    %74 = vector.shape_cast %73 : vector<1x1x8x16xf32> to vector<8x16xf32>
    %c2_i32_37 = arith.constant 2 : i32
    %75 = arith.addi %1, %c2_i32_37 : i32
    %c0_38 = arith.constant 0 : index
    %c1_39 = arith.constant 1 : index
    %76 = arith.index_cast %75 : i32 to index
    %c0_40 = arith.constant 0 : index
    %77 = vector.load %arg2[%c0_38, %c1_39, %76, %c0_40] : memref<1x2x24x128xf32, #tpu.memory_space<vmem>>, vector<1x1x8x16xf32>
    %78 = vector.shape_cast %77 : vector<1x1x8x16xf32> to vector<8x16xf32>
    %cst_41 = arith.constant -2.000000e+00 : f32
    %79 = vector.broadcast %cst_41 : f32 to vector<8x16xf32>
    %80 = arith.subf %79, %74 : vector<8x16xf32>
    %cst_42 = arith.constant 0.000000e+00 : f32
    %81 = vector.broadcast %cst_42 : f32 to vector<8x16xf32>
    %82 = arith.subf %81, %78 : vector<8x16xf32>
    %83 = arith.mulf %80, %80 : vector<8x16xf32>
    %84 = arith.mulf %82, %82 : vector<8x16xf32>
    %85 = arith.addf %83, %84 : vector<8x16xf32>
    %86 = math.sqrt %85 : vector<8x16xf32>
    %87 = arith.addf %70, %86 : vector<8x16xf32>
    %c2_i32_43 = arith.constant 2 : i32
    %88 = arith.addi %1, %c2_i32_43 : i32
    %c0_44 = arith.constant 0 : index
    %c0_45 = arith.constant 0 : index
    %89 = arith.index_cast %88 : i32 to index
    %c1_46 = arith.constant 1 : index
    %90 = vector.load %arg2[%c0_44, %c0_45, %89, %c1_46] : memref<1x2x24x128xf32, #tpu.memory_space<vmem>>, vector<1x1x8x16xf32>
    %91 = vector.shape_cast %90 : vector<1x1x8x16xf32> to vector<8x16xf32>
    %c2_i32_47 = arith.constant 2 : i32
    %92 = arith.addi %1, %c2_i32_47 : i32
    %c0_48 = arith.constant 0 : index
    %c1_49 = arith.constant 1 : index
    %93 = arith.index_cast %92 : i32 to index
    %c1_50 = arith.constant 1 : index
    %94 = vector.load %arg2[%c0_48, %c1_49, %93, %c1_50] : memref<1x2x24x128xf32, #tpu.memory_space<vmem>>, vector<1x1x8x16xf32>
    %95 = vector.shape_cast %94 : vector<1x1x8x16xf32> to vector<8x16xf32>
    %cst_51 = arith.constant -1.000000e+00 : f32
    %96 = vector.broadcast %cst_51 : f32 to vector<8x16xf32>
    %97 = arith.subf %96, %91 : vector<8x16xf32>
    %cst_52 = arith.constant 0.000000e+00 : f32
    %98 = vector.broadcast %cst_52 : f32 to vector<8x16xf32>
    %99 = arith.subf %98, %95 : vector<8x16xf32>
    %100 = arith.mulf %97, %97 : vector<8x16xf32>
    %101 = arith.mulf %99, %99 : vector<8x16xf32>
    %102 = arith.addf %100, %101 : vector<8x16xf32>
    %103 = math.sqrt %102 : vector<8x16xf32>
    %104 = arith.addf %87, %103 : vector<8x16xf32>
    %c2_i32_53 = arith.constant 2 : i32
    %105 = arith.addi %1, %c2_i32_53 : i32
    %c0_54 = arith.constant 0 : index
    %c0_55 = arith.constant 0 : index
    %106 = arith.index_cast %105 : i32 to index
    %c2_56 = arith.constant 2 : index
    %107 = vector.load %arg2[%c0_54, %c0_55, %106, %c2_56] : memref<1x2x24x128xf32, #tpu.memory_space<vmem>>, vector<1x1x8x16xf32>
    %108 = vector.shape_cast %107 : vector<1x1x8x16xf32> to vector<8x16xf32>
    %c2_i32_57 = arith.constant 2 : i32
    %109 = arith.addi %1, %c2_i32_57 : i32
    %c0_58 = arith.constant 0 : index
    %c1_59 = arith.constant 1 : index
    %110 = arith.index_cast %109 : i32 to index
    %c2_60 = arith.constant 2 : index
    %111 = vector.load %arg2[%c0_58, %c1_59, %110, %c2_60] : memref<1x2x24x128xf32, #tpu.memory_space<vmem>>, vector<1x1x8x16xf32>
    %112 = vector.shape_cast %111 : vector<1x1x8x16xf32> to vector<8x16xf32>
    %cst_61 = arith.constant 0.000000e+00 : f32
    %113 = vector.broadcast %cst_61 : f32 to vector<8x16xf32>
    %114 = arith.subf %113, %108 : vector<8x16xf32>
    %cst_62 = arith.constant 0.000000e+00 : f32
    %115 = vector.broadcast %cst_62 : f32 to vector<8x16xf32>
    %116 = arith.subf %115, %112 : vector<8x16xf32>
    %117 = arith.mulf %114, %114 : vector<8x16xf32>
    %118 = arith.mulf %116, %116 : vector<8x16xf32>
    %119 = arith.addf %117, %118 : vector<8x16xf32>
    %120 = math.sqrt %119 : vector<8x16xf32>
    %121 = arith.addf %104, %120 : vector<8x16xf32>
    %c2_i32_63 = arith.constant 2 : i32
    %122 = arith.addi %1, %c2_i32_63 : i32
    %c0_64 = arith.constant 0 : index
    %c0_65 = arith.constant 0 : index
    %123 = arith.index_cast %122 : i32 to index
    %c3_66 = arith.constant 3 : index
    %124 = vector.load %arg2[%c0_64, %c0_65, %123, %c3_66] : memref<1x2x24x128xf32, #tpu.memory_space<vmem>>, vector<1x1x8x16xf32>
    %125 = vector.shape_cast %124 : vector<1x1x8x16xf32> to vector<8x16xf32>
    %c2_i32_67 = arith.constant 2 : i32
    %126 = arith.addi %1, %c2_i32_67 : i32
    %c0_68 = arith.constant 0 : index
    %c1_69 = arith.constant 1 : index
    %127 = arith.index_cast %126 : i32 to index
    %c3_70 = arith.constant 3 : index
    %128 = vector.load %arg2[%c0_68, %c1_69, %127, %c3_70] : memref<1x2x24x128xf32, #tpu.memory_space<vmem>>, vector<1x1x8x16xf32>
    %129 = vector.shape_cast %128 : vector<1x1x8x16xf32> to vector<8x16xf32>
    %cst_71 = arith.constant 1.000000e+00 : f32
    %130 = vector.broadcast %cst_71 : f32 to vector<8x16xf32>
    %131 = arith.subf %130, %125 : vector<8x16xf32>
    %cst_72 = arith.constant 0.000000e+00 : f32
    %132 = vector.broadcast %cst_72 : f32 to vector<8x16xf32>
    %133 = arith.subf %132, %129 : vector<8x16xf32>
    %134 = arith.mulf %131, %131 : vector<8x16xf32>
    %135 = arith.mulf %133, %133 : vector<8x16xf32>
    %136 = arith.addf %134, %135 : vector<8x16xf32>
    %137 = math.sqrt %136 : vector<8x16xf32>
    %138 = arith.addf %121, %137 : vector<8x16xf32>
    %c2_i32_73 = arith.constant 2 : i32
    %139 = arith.addi %1, %c2_i32_73 : i32
    %c0_74 = arith.constant 0 : index
    %c0_75 = arith.constant 0 : index
    %140 = arith.index_cast %139 : i32 to index
    %c4 = arith.constant 4 : index
    %141 = vector.load %arg2[%c0_74, %c0_75, %140, %c4] : memref<1x2x24x128xf32, #tpu.memory_space<vmem>>, vector<1x1x8x16xf32>
    %142 = vector.shape_cast %141 : vector<1x1x8x16xf32> to vector<8x16xf32>
    %c2_i32_76 = arith.constant 2 : i32
    %143 = arith.addi %1, %c2_i32_76 : i32
    %c0_77 = arith.constant 0 : index
    %c1_78 = arith.constant 1 : index
    %144 = arith.index_cast %143 : i32 to index
    %c4_79 = arith.constant 4 : index
    %145 = vector.load %arg2[%c0_77, %c1_78, %144, %c4_79] : memref<1x2x24x128xf32, #tpu.memory_space<vmem>>, vector<1x1x8x16xf32>
    %146 = vector.shape_cast %145 : vector<1x1x8x16xf32> to vector<8x16xf32>
    %cst_80 = arith.constant 2.000000e+00 : f32
    %147 = vector.broadcast %cst_80 : f32 to vector<8x16xf32>
    %148 = arith.subf %147, %142 : vector<8x16xf32>
    %cst_81 = arith.constant 0.000000e+00 : f32
    %149 = vector.broadcast %cst_81 : f32 to vector<8x16xf32>
    %150 = arith.subf %149, %146 : vector<8x16xf32>
    %151 = arith.mulf %148, %148 : vector<8x16xf32>
    %152 = arith.mulf %150, %150 : vector<8x16xf32>
    %153 = arith.addf %151, %152 : vector<8x16xf32>
    %154 = math.sqrt %153 : vector<8x16xf32>
    %155 = arith.addf %138, %154 : vector<8x16xf32>
    %c3_i32 = arith.constant 3 : i32
    %156 = arith.addi %1, %c3_i32 : i32
    %c0_82 = arith.constant 0 : index
    %c0_83 = arith.constant 0 : index
    %157 = arith.index_cast %156 : i32 to index
    %c1_84 = arith.constant 1 : index
    %158 = vector.load %arg2[%c0_82, %c0_83, %157, %c1_84] : memref<1x2x24x128xf32, #tpu.memory_space<vmem>>, vector<1x1x8x16xf32>
    %159 = vector.shape_cast %158 : vector<1x1x8x16xf32> to vector<8x16xf32>
    %c3_i32_85 = arith.constant 3 : i32
    %160 = arith.addi %1, %c3_i32_85 : i32
    %c0_86 = arith.constant 0 : index
    %c1_87 = arith.constant 1 : index
    %161 = arith.index_cast %160 : i32 to index
    %c1_88 = arith.constant 1 : index
    %162 = vector.load %arg2[%c0_86, %c1_87, %161, %c1_88] : memref<1x2x24x128xf32, #tpu.memory_space<vmem>>, vector<1x1x8x16xf32>
    %163 = vector.shape_cast %162 : vector<1x1x8x16xf32> to vector<8x16xf32>
    %cst_89 = arith.constant -1.000000e+00 : f32
    %164 = vector.broadcast %cst_89 : f32 to vector<8x16xf32>
    %165 = arith.subf %164, %159 : vector<8x16xf32>
    %cst_90 = arith.constant 1.000000e+00 : f32
    %166 = vector.broadcast %cst_90 : f32 to vector<8x16xf32>
    %167 = arith.subf %166, %163 : vector<8x16xf32>
    %168 = arith.mulf %165, %165 : vector<8x16xf32>
    %169 = arith.mulf %167, %167 : vector<8x16xf32>
    %170 = arith.addf %168, %169 : vector<8x16xf32>
    %171 = math.sqrt %170 : vector<8x16xf32>
    %172 = arith.addf %155, %171 : vector<8x16xf32>
    %c3_i32_91 = arith.constant 3 : i32
    %173 = arith.addi %1, %c3_i32_91 : i32
    %c0_92 = arith.constant 0 : index
    %c0_93 = arith.constant 0 : index
    %174 = arith.index_cast %173 : i32 to index
    %c2_94 = arith.constant 2 : index
    %175 = vector.load %arg2[%c0_92, %c0_93, %174, %c2_94] : memref<1x2x24x128xf32, #tpu.memory_space<vmem>>, vector<1x1x8x16xf32>
    %176 = vector.shape_cast %175 : vector<1x1x8x16xf32> to vector<8x16xf32>
    %c3_i32_95 = arith.constant 3 : i32
    %177 = arith.addi %1, %c3_i32_95 : i32
    %c0_96 = arith.constant 0 : index
    %c1_97 = arith.constant 1 : index
    %178 = arith.index_cast %177 : i32 to index
    %c2_98 = arith.constant 2 : index
    %179 = vector.load %arg2[%c0_96, %c1_97, %178, %c2_98] : memref<1x2x24x128xf32, #tpu.memory_space<vmem>>, vector<1x1x8x16xf32>
    %180 = vector.shape_cast %179 : vector<1x1x8x16xf32> to vector<8x16xf32>
    %cst_99 = arith.constant 0.000000e+00 : f32
    %181 = vector.broadcast %cst_99 : f32 to vector<8x16xf32>
    %182 = arith.subf %181, %176 : vector<8x16xf32>
    %cst_100 = arith.constant 1.000000e+00 : f32
    %183 = vector.broadcast %cst_100 : f32 to vector<8x16xf32>
    %184 = arith.subf %183, %180 : vector<8x16xf32>
    %185 = arith.mulf %182, %182 : vector<8x16xf32>
    %186 = arith.mulf %184, %184 : vector<8x16xf32>
    %187 = arith.addf %185, %186 : vector<8x16xf32>
    %188 = math.sqrt %187 : vector<8x16xf32>
    %189 = arith.addf %172, %188 : vector<8x16xf32>
    %c3_i32_101 = arith.constant 3 : i32
    %190 = arith.addi %1, %c3_i32_101 : i32
    %c0_102 = arith.constant 0 : index
    %c0_103 = arith.constant 0 : index
    %191 = arith.index_cast %190 : i32 to index
    %c3_104 = arith.constant 3 : index
    %192 = vector.load %arg2[%c0_102, %c0_103, %191, %c3_104] : memref<1x2x24x128xf32, #tpu.memory_space<vmem>>, vector<1x1x8x16xf32>
    %193 = vector.shape_cast %192 : vector<1x1x8x16xf32> to vector<8x16xf32>
    %c3_i32_105 = arith.constant 3 : i32
    %194 = arith.addi %1, %c3_i32_105 : i32
    %c0_106 = arith.constant 0 : index
    %c1_107 = arith.constant 1 : index
    %195 = arith.index_cast %194 : i32 to index
    %c3_108 = arith.constant 3 : index
    %196 = vector.load %arg2[%c0_106, %c1_107, %195, %c3_108] : memref<1x2x24x128xf32, #tpu.memory_space<vmem>>, vector<1x1x8x16xf32>
    %197 = vector.shape_cast %196 : vector<1x1x8x16xf32> to vector<8x16xf32>
    %cst_109 = arith.constant 1.000000e+00 : f32
    %198 = vector.broadcast %cst_109 : f32 to vector<8x16xf32>
    %199 = arith.subf %198, %193 : vector<8x16xf32>
    %cst_110 = arith.constant 1.000000e+00 : f32
    %200 = vector.broadcast %cst_110 : f32 to vector<8x16xf32>
    %201 = arith.subf %200, %197 : vector<8x16xf32>
    %202 = arith.mulf %199, %199 : vector<8x16xf32>
    %203 = arith.mulf %201, %201 : vector<8x16xf32>
    %204 = arith.addf %202, %203 : vector<8x16xf32>
    %205 = math.sqrt %204 : vector<8x16xf32>
    %206 = arith.addf %189, %205 : vector<8x16xf32>
    %c4_i32 = arith.constant 4 : i32
    %207 = arith.addi %1, %c4_i32 : i32
    %c0_111 = arith.constant 0 : index
    %c0_112 = arith.constant 0 : index
    %208 = arith.index_cast %207 : i32 to index
    %c2_113 = arith.constant 2 : index
    %209 = vector.load %arg2[%c0_111, %c0_112, %208, %c2_113] : memref<1x2x24x128xf32, #tpu.memory_space<vmem>>, vector<1x1x8x16xf32>
    %210 = vector.shape_cast %209 : vector<1x1x8x16xf32> to vector<8x16xf32>
    %c4_i32_114 = arith.constant 4 : i32
    %211 = arith.addi %1, %c4_i32_114 : i32
    %c0_115 = arith.constant 0 : index
    %c1_116 = arith.constant 1 : index
    %212 = arith.index_cast %211 : i32 to index
    %c2_117 = arith.constant 2 : index
    %213 = vector.load %arg2[%c0_115, %c1_116, %212, %c2_117] : memref<1x2x24x128xf32, #tpu.memory_space<vmem>>, vector<1x1x8x16xf32>
    %214 = vector.shape_cast %213 : vector<1x1x8x16xf32> to vector<8x16xf32>
    %cst_118 = arith.constant 0.000000e+00 : f32
    %215 = vector.broadcast %cst_118 : f32 to vector<8x16xf32>
    %216 = arith.subf %215, %210 : vector<8x16xf32>
    %cst_119 = arith.constant 2.000000e+00 : f32
    %217 = vector.broadcast %cst_119 : f32 to vector<8x16xf32>
    %218 = arith.subf %217, %214 : vector<8x16xf32>
    %219 = arith.mulf %216, %216 : vector<8x16xf32>
    %220 = arith.mulf %218, %218 : vector<8x16xf32>
    %221 = arith.addf %219, %220 : vector<8x16xf32>
    %222 = math.sqrt %221 : vector<8x16xf32>
    %223 = arith.addf %206, %222 : vector<8x16xf32>
    %cst_120 = arith.constant 0.0769230798 : f32
    %224 = vector.broadcast %cst_120 : f32 to vector<8x16xf32>
    %225 = arith.mulf %223, %224 : vector<8x16xf32>
    %cst_121 = arith.constant 1.000000e+00 : f32
    %226 = vector.broadcast %cst_121 : f32 to vector<8x16xf32>
    %227 = arith.addf %225, %226 : vector<8x16xf32>
    %c0_122 = arith.constant 0 : index
    %c0_123 = arith.constant 0 : index
    %c0_124 = arith.constant 0 : index
    %228 = vector.load %arg3[%c0_122, %c0_123, %c0_124] : memref<1x8x16xf32, #tpu.memory_space<vmem>>, vector<1x8x16xf32>
    %229 = vector.shape_cast %228 : vector<1x8x16xf32> to vector<8x16xf32>
    %230 = vector.shape_cast %227 : vector<8x16xf32> to vector<1x8x16xf32>
    tpu.vector_store %arg3[%c0_122, %c0_123, %c0_124], %230 {strides = array<i32>} : memref<1x8x16xf32, #tpu.memory_space<vmem>>, vector<1x8x16xf32>,
    return
  }
  func.func @transform_0(%arg0: i32, %arg1: i32) -> (i32, i32, i32, i32) {
    %c0_i32 = arith.constant 0 : i32
    %c0_i32_0 = arith.constant 0 : i32
    %c0_i32_1 = arith.constant 0 : i32
    %c0_i32_2 = arith.constant 0 : i32
    return %arg0, %c0_i32, %c0_i32_0, %c0_i32_1 : i32, i32, i32, i32
  }
  func.func @transform_1(%arg0: i32, %arg1: i32) -> (i32, i32, i32) {
    %c0_i32 = arith.constant 0 : i32
    %c0_i32_0 = arith.constant 0 : i32
    return %arg0, %arg1, %c0_i32 : i32, i32, i32
  }
}

</mosaic_0001>

<llo_original>
// kernel: tpu_custom_call.1
$region0: #{tpu_custom_call.1}
  #allocation0 [shape = 'u32[]', space=smem, size = 0x4, offset = 0x4, fixed_abs, tag = 'smem constant byte address 0x4 - core index']
  #allocation1 [shape = 'u32[144,128]{1,0:T(1,128)}', space=vmem, size = 0x12000, scoped, tag = 'internal scratch']
  %s0 = inlined_call_operand.hbm [shape: f32[2,2,24,128], index: 0, kind: input, shape index: {}]
  %s1 = inlined_call_operand.hbm [shape: f32[2,16,16], index: 1, kind: output, shape index: {}]
  %s2 = sld [smem:[#allocation0]]
  $region41: #{tpu_custom_call.1} parent=0
    _
  %s4 = ssub.s32 1, %s2
  %s5 = scalar_select 0, %s4, %s2
  $region1: #{tpu_custom_call.1} parent=0
    #allocation2 [shape = 'u8[49152]{0}', space=vmem, size = 0xc000, scoped, tag = 'input window, operand 0']
    #allocation3 [shape = 's32[2]{0}', space=sflag, size = 0x8, scoped, tag = 'scoped memory for tpu_custom_call.1']
    #allocation4 [shape = 's32[2]{0}', space=sflag, size = 0x8, scoped, tag = 'scoped memory for tpu_custom_call.1']
    #allocation5 [shape = 'u8[8192]{0}', space=vmem, size = 0x2000, scoped, tag = 'output window, operand 0']
    %6 = vsyncpa [#allocation3], 0
    %s7 = scalar_lea.sflag [#allocation3], 1
    %8 = vsyncpa %s7, 0
    %9 = vsyncpa [#allocation4], 0
    %s10 = scalar_lea.sflag [#allocation4], 1
    %11 = vsyncpa %s10, 0
    loop: start=0, step=1, limit=6
    $region2: #{tpu_custom_call.1} parent=1 // loop_pre_header
      _
    $region3: #{tpu_custom_call.1} parent=1 // loop_header
      %s13 = sphi 0, %s17
      %p14 = scmp.ge.s32.totalorder %s13, 6
      %s20 = sphi 0, %s32
      %s21 = sphi 0, %s28
      %s22 = sphi 0, %s20
      %s23 = sphi 0, %s21
      %s24 = sphi 0, %s22
      %s25 = sphi 0, %s23
      %s35 = sphi 0, %s37
      %s38 = sphi 0, %s35
      %s39 = sphi 0, %s38
      %s55 = sphi 0, %s39
      %s63 = sphi 0, %s65
      %s66 = sphi 0, %s63
      %s67 = sphi 0, %s66
      %s83 = sphi 0, %s67
    $region4: #{tpu_custom_call.1} parent=1 // loop_header_branch
      %16 = sbr.rel (%p14) target = $region8
    $region5: #{tpu_custom_call.1} parent=1 // loop_body
      %s18 = ssub.s32 %s13, 1
      %s19 = ssub.s32 %s13, 2
      %s26 = sadd.s32 1, %s21
      %p27 = scmp.ge.s32.totalorder %s26, 2
      %s28 = scalar_select %p27, 0, %s26
      %s29 = sadd.s32 1, %s20
      %s30 = scalar_select %p27, %s29, %s20
      %p31 = scmp.ge.s32.totalorder %s30, 2
      %s32 = scalar_select %p31, 0, %s30
      %s33 = ssub.s32 %s20, %s32
      %p34 = scmp.eq.s32.totalorder %s33, 0
      %s36 = sadd.s32 %s35, 1
      %s37 = scalar_select %p34, %s35, %s36
      %p40 = pneg %p34
      %p41 = scmp.eq.s32.totalorder %s13, 3
      %p42 = por %p40, %p41
      %p43 = scmp.ne.s32.totalorder %s35, %s38
      %p44 = scmp.eq.s32.totalorder %s13, 0
      %p45 = por %p43, %p44
      %p46 = scmp.ne.s32.totalorder %s35, %s38
      %p47 = scmp.eq.s32.totalorder %s18, 3
      %p48 = por %p46, %p47
      %p49 = scmp.ne.s32.totalorder %s38, %s39
      %p50 = scmp.eq.s32.totalorder %s18, 0
      %p51 = por %p49, %p50
      %p52 = scmp.ne.s32.totalorder %s38, %s39
      %p53 = scmp.eq.s32.totalorder %s19, 3
      %p54 = por %p52, %p53
      %p56 = scmp.ne.s32.totalorder %s39, %s55
      %p57 = scmp.eq.s32.totalorder %s19, 0
      %p58 = por %p56, %p57
      %s59 = ssub.s32 %s20, %s32
      %s60 = ssub.s32 %s21, %s28
      %s61 = sor.u32 %s59, %s60
      %p62 = scmp.eq.s32.totalorder %s61, 0
      %s64 = sadd.s32 %s63, 1
      %s65 = scalar_select %p62, %s63, %s64
      %p68 = pneg %p62
      %p69 = scmp.eq.s32.totalorder %s13, 3
      %p70 = por %p68, %p69
      %p71 = scmp.ne.s32.totalorder %s63, %s66
      %p72 = scmp.eq.s32.totalorder %s13, 0
      %p73 = por %p71, %p72
      %p74 = scmp.ne.s32.totalorder %s63, %s66
      %p75 = scmp.eq.s32.totalorder %s18, 3
      %p76 = por %p74, %p75
      %p77 = scmp.ne.s32.totalorder %s66, %s67
      %p78 = scmp.eq.s32.totalorder %s18, 0
      %p79 = por %p77, %p78
      %p80 = scmp.ne.s32.totalorder %s66, %s67
      %p81 = scmp.eq.s32.totalorder %s19, 3
      %p82 = por %p80, %p81
      %p84 = scmp.ne.s32.totalorder %s67, %s83
      %p85 = scmp.eq.s32.totalorder %s19, 0
      %p86 = por %p84, %p85
      %p87 = scmp.le.s32.totalorder 1, %s13
      %p88 = scmp.lt.s32.totalorder %s13, 5
      %p89 = pnand %p87, %p88
      %p90 = pneg %p89
      // Predicated region
      $region9: #{tpu_custom_call.1} parent=5 // pred_check
        _
      $region10: #{tpu_custom_call.1} parent=5 // pred_check_branch
        %92 = sbr.rel (%p89) target = $region12
      $region11: #{tpu_custom_call.1} parent=5 // pred_region
        %s93 = ssub.s32 %s13, 1
      $region12: #{tpu_custom_call.1} parent=5 // pred_fallthru
        _
      %p94 = scmp.lt.s32.totalorder %s13, 4
      // Predicated region
      $region13: #{tpu_custom_call.1} parent=5 // pred_check
        %p95 = pneg %p94
      $region14: #{tpu_custom_call.1} parent=5 // pred_check_branch
        %97 = sbr.rel (%p95) target = $region16
      $region15: #{tpu_custom_call.1} parent=5 // pred_region
        // Predicated region
        $region17: #{tpu_custom_call.1} parent=15 // pred_check
          %p98 = pneg %p45
        $region18: #{tpu_custom_call.1} parent=15 // pred_check_branch
          %100 = sbr.rel (%p98) target = $region20
        $region19: #{tpu_custom_call.1} parent=15 // pred_region
          %s101 = sand.u32 %s35, 1
          %s102 = scalar_lea.sflag [#allocation3], %s101
          %s103 = sand.u32 %s35, 1
          %s104 = smul.addr %s103, 48
          %s105 = scalar_lea.vmem [#allocation2], %s104
          %s107 = ssub.s32 768, 768
          %108 = vsyncadd %s102, %s107
          %s109 = smul.addr %s20, 6
          %s110 = smul.addr %s109, 128
          %s111 = scalar_lea.hbm %s0, %s110
          %s112 = sshll.u32 %s105, 4
          %s113 = int_to_ptr.vmem [resolvable:$true] %s112
          %118 = dma.hbm_to_vmem [thread:$0]  %s111, 768, %s113, %s102, 128, 128, 8
        $region20: #{tpu_custom_call.1} parent=15 // pred_fallthru
          _
      $region16: #{tpu_custom_call.1} parent=5 // pred_fallthru
        _
      %p119 = scmp.le.s32.totalorder 1, %s13
      %p120 = scmp.lt.s32.totalorder %s13, 5
      %p121 = pnand %p119, %p120
      %p122 = pneg %p121
      // Predicated region
      $region21: #{tpu_custom_call.1} parent=5 // pred_check
        _
      $region22: #{tpu_custom_call.1} parent=5 // pred_check_branch
        %124 = sbr.rel (%p121) target = $region24
      $region23: #{tpu_custom_call.1} parent=5 // pred_region
        %s125 = ssub.s32 %s13, 1
        %s126 = sand.u32 %s38, 1
        %s127 = scalar_lea.sflag [#allocation3], %s126
        %s128 = sand.u32 %s38, 1
        %s129 = smul.addr %s128, 48
        %s130 = scalar_lea.vmem [#allocation2], %s129
        // Predicated region
        $region25: #{tpu_custom_call.1} parent=23 // pred_check
          %p131 = pneg %p51
        $region26: #{tpu_custom_call.1} parent=23 // pred_check_branch
          %133 = sbr.rel (%p131) target = $region28
        $region27: #{tpu_custom_call.1} parent=23 // pred_region
          %134 = dma.done %s127, 768
        $region28: #{tpu_custom_call.1} parent=23 // pred_fallthru
          _
        %s135 = sand.u32 %s38, 1
        %s136 = scalar_lea.sflag [#allocation3], %s135
        %s137 = sand.u32 %s38, 1
        %s138 = smul.addr %s137, 48
        %s139 = scalar_lea.vmem [#allocation2], %s138
        %p140 = pneg %p51
        %p141 = pneg %p48
        %p142 = pneg %p79
        %p143 = pneg %p76
        %s144 = sand.u32 %s66, 1
        %s145 = scalar_lea.sflag [#allocation4], %s144
        %s146 = sand.u32 %s66, 1
        %s147 = smul.addr %s146, 8
        %s148 = scalar_lea.vmem [#allocation5], %s147
        %s149 = smul.u32 %s23, 8
        %s150 = scalar_lea.vmem %s130, %s149 [#allocation2]
        %v151 = vld [vmem:[%s150] sm:$0xff]
        %s152 = sadd.s32 %s149, 24
        %s153 = scalar_lea.vmem %s130, %s152 [#allocation2]
        %v154 = vld [vmem:[%s153] sm:$0xff]
        %v155 = vsub.f32 0.0, %v151
        %v156 = vsub.f32 -2.0, %v154
        %v157 = vmul.f32 %v155, %v155
        %v158 = vmul.f32 %v156, %v156
        %v159 = vadd.f32 %v157, %v158
        %v160 = vrsqrt.pop %v159
        %v161 = vmul.f32 %v159, %v160
        %vm162 = vcmp.eq.f32.partialorder %v159, inf
        %v163 = vsel %vm162, %v159, %v161
        %vm164 = vcmp.eq.f32.partialorder %v159, 0.0
        %v165 = vand.u32 %v159, 2147483648
        %v166 = vsel %vm164, %v165, %v163
        %v167 = vadd.f32 %v166, 0.0
        %s168 = sadd.s32 %s149, 1
        %s169 = scalar_lea.vmem %s130, %s168 [#allocation2]
        %v170 = vld [vmem:[%s169] sm:$0xff]
        %s171 = sadd.s32 %s168, 24
        %s172 = scalar_lea.vmem %s130, %s171 [#allocation2]
        %v173 = vld [vmem:[%s172] sm:$0xff]
        %v174 = vsub.f32 -1.0, %v170
        %v175 = vsub.f32 -1.0, %v173
        %v176 = vmul.f32 %v174, %v174
        %v177 = vmul.f32 %v175, %v175
        %v178 = vadd.f32 %v176, %v177
        %v179 = vrsqrt.pop %v178
        %v180 = vmul.f32 %v178, %v179
        %vm181 = vcmp.eq.f32.partialorder %v178, inf
        %v182 = vsel %vm181, %v178, %v180
        %vm183 = vcmp.eq.f32.partialorder %v178, 0.0
        %v184 = vand.u32 %v178, 2147483648
        %v185 = vsel %vm183, %v184, %v182
        %187 = vrot.lane.b32.xlu0 %v185, 1
        %v188 = vpop.permute.xlu0 %187
        %v190 = vadd.f32 %v167, %v188
        %v191 = vsub.f32 0.0, %v170
        %v192 = vmul.f32 %v191, %v191
        %v193 = vadd.f32 %v192, %v177
        %v194 = vrsqrt.pop %v193
        %v195 = vmul.f32 %v193, %v194
        %vm196 = vcmp.eq.f32.partialorder %v193, inf
        %v197 = vsel %vm196, %v193, %v195
        %vm198 = vcmp.eq.f32.partialorder %v193, 0.0
        %v199 = vand.u32 %v193, 2147483648
        %v200 = vsel %vm198, %v199, %v197
        %v201 = vadd.f32 %v190, %v200
        %v202 = vsub.f32 1.0, %v170
        %v203 = vmul.f32 %v202, %v202
        %v204 = vadd.f32 %v203, %v177
        %v205 = vrsqrt.pop %v204
        %v206 = vmul.f32 %v204, %v205
        %vm207 = vcmp.eq.f32.partialorder %v204, inf
        %v208 = vsel %vm207, %v204, %v206
        %vm209 = vcmp.eq.f32.partialorder %v204, 0.0
        %v210 = vand.u32 %v204, 2147483648
        %v211 = vsel %vm209, %v210, %v208
        %213 = vrot.lane.b32.xlu0 %v211, 127
        %v214 = vpop.permute.xlu0 %213
        %v216 = vadd.f32 %v201, %v214
        %s217 = sadd.s32 %s149, 2
        %s218 = scalar_lea.vmem %s130, %s217 [#allocation2]
        %v219 = vld [vmem:[%s218] sm:$0xff]
        %s220 = sadd.s32 %s217, 24
        %s221 = scalar_lea.vmem %s130, %s220 [#allocation2]
        %v222 = vld [vmem:[%s221] sm:$0xff]
        %v223 = vsub.f32 -2.0, %v219
        %v224 = vsub.f32 0.0, %v222
        %v225 = vmul.f32 %v223, %v223
        %v226 = vmul.f32 %v224, %v224
        %v227 = vadd.f32 %v225, %v226
        %v228 = vrsqrt.pop %v227
        %v229 = vmul.f32 %v227, %v228
        %vm230 = vcmp.eq.f32.partialorder %v227, inf
        %v231 = vsel %vm230, %v227, %v229
        %vm232 = vcmp.eq.f32.partialorder %v227, 0.0
        %v233 = vand.u32 %v227, 2147483648
        %v234 = vsel %vm232, %v233, %v231
        %236 = vrot.lane.b32.xlu0 %v234, 2
        %v237 = vpop.permute.xlu0 %236
        %v239 = vadd.f32 %v216, %v237
        %v240 = vsub.f32 -1.0, %v219
        %v241 = vmul.f32 %v240, %v240
        %v242 = vadd.f32 %v241, %v226
        %v243 = vrsqrt.pop %v242
        %v244 = vmul.f32 %v242, %v243
        %vm245 = vcmp.eq.f32.partialorder %v242, inf
        %v246 = vsel %vm245, %v242, %v244
        %vm247 = vcmp.eq.f32.partialorder %v242, 0.0
        %v248 = vand.u32 %v242, 2147483648
        %v249 = vsel %vm247, %v248, %v246
        %251 = vrot.lane.b32.xlu0 %v249, 1
        %v252 = vpop.permute.xlu0 %251
        %v254 = vadd.f32 %v239, %v252
        %v255 = vsub.f32 0.0, %v219
        %v256 = vmul.f32 %v255, %v255
        %v257 = vadd.f32 %v256, %v226
        %v258 = vrsqrt.pop %v257
        %v259 = vmul.f32 %v257, %v258
        %vm260 = vcmp.eq.f32.partialorder %v257, inf
        %v261 = vsel %vm260, %v257, %v259
        %vm262 = vcmp.eq.f32.partialorder %v257, 0.0
        %v263 = vand.u32 %v257, 2147483648
        %v264 = vsel %vm262, %v263, %v261
        %v265 = vadd.f32 %v254, %v264
        %v266 = vsub.f32 1.0, %v219
        %v267 = vmul.f32 %v266, %v266
        %v268 = vadd.f32 %v267, %v226
        %v269 = vrsqrt.pop %v268
        %v270 = vmul.f32 %v268, %v269
        %vm271 = vcmp.eq.f32.partialorder %v268, inf
        %v272 = vsel %vm271, %v268, %v270
        %vm273 = vcmp.eq.f32.partialorder %v268, 0.0
        %v274 = vand.u32 %v268, 2147483648
        %v275 = vsel %vm273, %v274, %v272
        %277 = vrot.lane.b32.xlu0 %v275, 127
        %v278 = vpop.permute.xlu0 %277
        %v280 = vadd.f32 %v265, %v278
        %v281 = vsub.f32 2.0, %v219
        %v282 = vmul.f32 %v281, %v281
        %v283 = vadd.f32 %v282, %v226
        %v284 = vrsqrt.pop %v283
        %v285 = vmul.f32 %v283, %v284
        %vm286 = vcmp.eq.f32.partialorder %v283, inf
        %v287 = vsel %vm286, %v283, %v285
        %vm288 = vcmp.eq.f32.partialorder %v283, 0.0
        %v289 = vand.u32 %v283, 2147483648
        %v290 = vsel %vm288, %v289, %v287
        %292 = vrot.lane.b32.xlu0 %v290, 126
        %v293 = vpop.permute.xlu0 %292
        %v295 = vadd.f32 %v280, %v293
        %s296 = sadd.s32 %s149, 3
        %s297 = scalar_lea.vmem %s130, %s296 [#allocation2]
        %v298 = vld [vmem:[%s297] sm:$0xff]
        %s299 = sadd.s32 %s296, 24
        %s300 = scalar_lea.vmem %s130, %s299 [#allocation2]
        %v301 = vld [vmem:[%s300] sm:$0xff]
        %v302 = vsub.f32 -1.0, %v298
        %v303 = vsub.f32 1.0, %v301
        %v304 = vmul.f32 %v302, %v302
        %v305 = vmul.f32 %v303, %v303
        %v306 = vadd.f32 %v304, %v305
        %v307 = vrsqrt.pop %v306
        %v308 = vmul.f32 %v306, %v307
        %vm309 = vcmp.eq.f32.partialorder %v306, inf
        %v310 = vsel %vm309, %v306, %v308
        %vm311 = vcmp.eq.f32.partialorder %v306, 0.0
        %v312 = vand.u32 %v306, 2147483648
        %v313 = vsel %vm311, %v312, %v310
        %315 = vrot.lane.b32.xlu0 %v313, 1
        %v316 = vpop.permute.xlu0 %315
        %v318 = vadd.f32 %v295, %v316
        %v319 = vsub.f32 0.0, %v298
        %v320 = vmul.f32 %v319, %v319
        %v321 = vadd.f32 %v320, %v305
        %v322 = vrsqrt.pop %v321
        %v323 = vmul.f32 %v321, %v322
        %vm324 = vcmp.eq.f32.partialorder %v321, inf
        %v325 = vsel %vm324, %v321, %v323
        %vm326 = vcmp.eq.f32.partialorder %v321, 0.0
        %v327 = vand.u32 %v321, 2147483648
        %v328 = vsel %vm326, %v327, %v325
        %v329 = vadd.f32 %v318, %v328
        %v330 = vsub.f32 1.0, %v298
        %v331 = vmul.f32 %v330, %v330
        %v332 = vadd.f32 %v331, %v305
        %v333 = vrsqrt.pop %v332
        %v334 = vmul.f32 %v332, %v333
        %vm335 = vcmp.eq.f32.partialorder %v332, inf
        %v336 = vsel %vm335, %v332, %v334
        %vm337 = vcmp.eq.f32.partialorder %v332, 0.0
        %v338 = vand.u32 %v332, 2147483648
        %v339 = vsel %vm337, %v338, %v336
        %341 = vrot.lane.b32.xlu0 %v339, 127
        %v342 = vpop.permute.xlu0 %341
        %v344 = vadd.f32 %v329, %v342
        %s345 = sadd.s32 %s149, 4
        %s346 = scalar_lea.vmem %s130, %s345 [#allocation2]
        %v347 = vld [vmem:[%s346] sm:$0xff]
        %s348 = sadd.s32 %s345, 24
        %s349 = scalar_lea.vmem %s130, %s348 [#allocation2]
        %v350 = vld [vmem:[%s349] sm:$0xff]
        %v351 = vsub.f32 0.0, %v347
        %v352 = vsub.f32 2.0, %v350
        %v353 = vmul.f32 %v351, %v351
        %v354 = vmul.f32 %v352, %v352
        %v355 = vadd.f32 %v353, %v354
        %v356 = vrsqrt.pop %v355
        %v357 = vmul.f32 %v355, %v356
        %vm358 = vcmp.eq.f32.partialorder %v355, inf
        %v359 = vsel %vm358, %v355, %v357
        %vm360 = vcmp.eq.f32.partialorder %v355, 0.0
        %v361 = vand.u32 %v355, 2147483648
        %v362 = vsel %vm360, %v361, %v359
        %v363 = vadd.f32 %v344, %v362
        %v364 = vmul.f32 %v363, 0.07692308
        %v365 = vadd.f32 %v364, 1.0
        %367 = vrot.lane.b32.xlu0 %v365, 126
        %v368 = vpop.permute.xlu0 %367
        %vm370 = vcmask 130048
        %371 = vst.msk [vmem:[%s148] sm:$0xff] %vm370, %v368
        %s372 = sand.u32 %s66, 1
        %s373 = scalar_lea.sflag [#allocation4], %s372
        %s374 = sand.u32 %s66, 1
        %s375 = smul.addr %s374, 8
        %s376 = scalar_lea.vmem [#allocation5], %s375
        // Predicated region
        $region29: #{tpu_custom_call.1} parent=23 // pred_check
          %p377 = pneg %p76
        $region30: #{tpu_custom_call.1} parent=23 // pred_check_branch
          %379 = sbr.rel (%p377) target = $region32
        $region31: #{tpu_custom_call.1} parent=23 // pred_region
          %s381 = ssub.s32 128, 128
          %382 = vsyncadd %s373, %s381
          %s383 = smul.addr %s22, 2
          %s384 = sadd.s32 %s23, %s383
          %s385 = smul.addr %s384, 128
          %s386 = scalar_lea.hbm %s1, %s385
          %s388 = sshll.u32 %s376, 4
          %s389 = int_to_ptr.vmem [resolvable:$true] %s388
          %391 = dma.vmem_to_hbm [thread:$0]  %s389, 128, %s386, %s373
        $region32: #{tpu_custom_call.1} parent=23 // pred_fallthru
          _
      $region24: #{tpu_custom_call.1} parent=5 // pred_fallthru
        _
      %p392 = scmp.le.s32.totalorder 2, %s13
      // Predicated region
      $region33: #{tpu_custom_call.1} parent=5 // pred_check
        %p393 = pneg %p392
      $region34: #{tpu_custom_call.1} parent=5 // pred_check_branch
        %395 = sbr.rel (%p393) target = $region36
      $region35: #{tpu_custom_call.1} parent=5 // pred_region
        %s396 = ssub.s32 %s13, 2
        // Predicated region
        $region37: #{tpu_custom_call.1} parent=35 // pred_check
          %p397 = pneg %p82
        $region38: #{tpu_custom_call.1} parent=35 // pred_check_branch
          %399 = sbr.rel (%p397) target = $region40
        $region39: #{tpu_custom_call.1} parent=35 // pred_region
          %s400 = sand.u32 %s67, 1
          %s401 = scalar_lea.sflag [#allocation4], %s400
          %s402 = sand.u32 %s67, 1
          %s403 = smul.addr %s402, 8
          %s404 = scalar_lea.vmem [#allocation5], %s403
          %405 = dma.done %s401, 128
        $region40: #{tpu_custom_call.1} parent=35 // pred_fallthru
          _
      $region36: #{tpu_custom_call.1} parent=5 // pred_fallthru
        _
    $region6: #{tpu_custom_call.1} parent=1 // loop_footer
      %s17 = sadd.s32 1, %s13
    $region7: #{tpu_custom_call.1} parent=1 // loop_footer_branch
      %12 = sbr.rel target = $region3
    $region8: #{tpu_custom_call.1} parent=1 // loop_exit
      _
    %406 = vsyncpa [#allocation3], 1
    %s407 = scalar_lea.sflag [#allocation3], 1
    %408 = vsyncpa %s407, 1
    %409 = vsyncpa [#allocation4], 1
    %s410 = scalar_lea.sflag [#allocation4], 1
    %411 = vsyncpa %s410, 1

</llo_original>
